<compile_context>
chip_gen: v6e
topology: v6e:2x2x1
jax: 0.10.0
libtpu: 0.0.40
codegen_flags: <defaults>
</compile_context>

<pallas_src>
import functools

import jax
import jax.numpy as jnp
from jax.experimental import pallas as pl
from jax.experimental.pallas import tpu as pltpu

_NANOMETER_TO_ANGSTROM = 10.0
_HARTREE_TO_KJ_MOL = 2625.499638755248


def _round_up(x: int, m: int) -> int:
    return ((x + m - 1) // m) * m


def _cdiv(a: int, b: int) -> int:
    return (a + b - 1) // b


def _vmem_cap_bytes() -> int:
    """Generation-aware VMEM cap (~75% of physical); 48 MiB fallback (v7x-safe)."""
    try:
        cap = int(pltpu.get_tpu_info().vmem_capacity_bytes)
        return max(16 << 20, int(0.75 * cap))
    except Exception:
        return 48 << 20


def _vmem_estimate(nq_pad: int, tile: int) -> int:
    """Per-step VMEM footprint using PADDED layouts (8 sublanes / 128 lanes)."""
    pair = nq_pad * tile * 4                 # one live (Nq, T) f32 intermediate
    mm_in = 8 * tile * 4                     # (4, T) block -> 8 sublanes in VMEM
    fmm_out = 8 * tile * 4                   # (3, T) block -> 8 sublanes in VMEM
    qm_in = nq_pad * 128 * 4                 # (Nq, 4) block -> 128 lanes in VMEM
    fnn_out = nq_pad * 128 * 4               # (Nq, 4) block -> 128 lanes in VMEM
    # ~12 live pairwise intermediates, double-buffered streaming blocks, slack.
    return 12 * pair + 2 * (mm_in + fmm_out) + 2 * (qm_in + fnn_out) + (1 << 20)


# --------------------------------------------------------------------------- #
# Pallas kernel: one MM tile of the QM/MM Coulomb energy + analytic forces.
# --------------------------------------------------------------------------- #
def _emle_kernel(qm_ref, mm_ref, out_nn_ref, f_mm_ref):
    """Grid = (splits, tiles_per_split). Axis 0 'parallel' (v7x dual-TC),
    axis 1 'arbitrary' (out_nn accumulates across it).

    qm_ref     : (Nq, 4)  f32, columns (x, y, z, 0.1*q)  [nm]       (resident)
    mm_ref     : (4, T)   f32, rows    (x, y, z, q)      [nm]       (per tile)
    out_nn_ref : (Nq, 4)  f32, cols 0:3 = -dE_H/dr_nn [Ha/nm],
                 col 3 = per-QM-atom energy partial [Ha]   (accumulated over t)
    f_mm_ref   : (3, T)   f32, -dE_H/dr_mm [Ha/nm]                  (per tile)
    """
    t = pl.program_id(1)

    @pl.when(t == 0)
    def _init():
        out_nn_ref[...] = jnp.zeros_like(out_nn_ref)

    qm = qm_ref[...]                              # (Nq, 4)
    mm = mm_ref[...]                              # (4, T)

    # Pairwise displacements: QM index on sublanes, MM index on lanes.
    dx = qm[:, 0:1] - mm[0:1, :]                  # (Nq, T)
    dy = qm[:, 1:2] - mm[1:2, :]
    dz = qm[:, 2:3] - mm[2:3, :]
    r2 = dx * dx + dy * dy + dz * dz              # direct form: no cancellation
    inv_r = jax.lax.rsqrt(r2)                     # EUP rsqrt (free slot)

    # q_nn already carries the 0.1 nm->Angstrom factor => pair_e is in Hartree.
    pair_e = (qm[:, 3:4] * mm[3:4, :]) * inv_r    # (Nq, T)  [Hartree]
    g = pair_e * (inv_r * inv_r)                  # [Hartree / nm^2]
    gx = g * dx
    gy = g * dy
    gz = g * dz

    # QM side: forces (lane reductions over MM) + per-atom energy partial,
    # accumulated across MM tiles in the resident (Nq, 4) output block.
    out_nn_ref[...] += jnp.concatenate(
        [jnp.sum(gx, axis=1, keepdims=True),
         jnp.sum(gy, axis=1, keepdims=True),
         jnp.sum(gz, axis=1, keepdims=True),
         jnp.sum(pair_e, axis=1, keepdims=True)], axis=1)

    # MM side: forces for this tile (sublane reductions over QM; lane-dense out).
    f_mm_ref[...] = -jnp.concatenate(
        [jnp.sum(gx, axis=0, keepdims=True),
         jnp.sum(gy, axis=0, keepdims=True),
         jnp.sum(gz, axis=0, keepdims=True)], axis=0)


def _run_emle_kernel(qm_data, mm_data, *, nm_tile: int, num_splits: int,
                     tiles_per_split: int, vmem_limit: int):
    nq_pad = qm_data.shape[0]
    nm_pad = mm_data.shape[1]

    out_shapes = (
        jax.ShapeDtypeStruct((num_splits, nq_pad, 4), jnp.float32),  # QM partials
        jax.ShapeDtypeStruct((3, nm_pad), jnp.float32),              # MM forces^T
    )

    grid_spec = pltpu.PrefetchScalarGridSpec(
        num_scalar_prefetch=0,
        grid=(num_splits, tiles_per_split),
        in_specs=[
            # QM block: resident (index constant -> fetched once).
            pl.BlockSpec((nq_pad, 4), lambda c, t: (0, 0)),
            # Merged MM stream: one lane-dense (4, T) block per step.
            pl.BlockSpec((4, nm_tile),
                         lambda c, t: (0, c * tiles_per_split + t)),
        ],
        out_specs=(
            # Per-split QM accumulator (forces + per-atom energy).
            pl.BlockSpec((None, nq_pad, 4), lambda c, t: (c, 0, 0)),
            # MM forces, lane-dense, written block-per-step.
            pl.BlockSpec((3, nm_tile),
                         lambda c, t: (0, c * tiles_per_split + t)),
        ),
    )

    return pl.pallas_call(
        _emle_kernel,
        out_shape=out_shapes,
        grid_spec=grid_spec,
        compiler_params=pltpu.CompilerParams(
            # Axis 0 splits MM tiles across TensorCores; axis 1 accumulates.
            dimension_semantics=("parallel", "arbitrary"),
            vmem_limit_bytes=vmem_limit,
        ),
    )(qm_data, mm_data)


# --------------------------------------------------------------------------- #
# Surrogate EMLE parameters + module-level forward
# --------------------------------------------------------------------------- #
def _make_parameters(max_z: int = 100):
    """Deterministic per-element surrogate parameters (no checkpoint load)."""
    z = jnp.arange(max_z, dtype=jnp.float32)
    charge_table = 0.05 * jnp.sin(0.7 * z) - 0.02 * jnp.cos(1.3 * z)
    energy_table = -0.5 * z - 0.01 * jnp.sin(z)
    return charge_table, energy_table


@functools.partial(jax.jit, static_argnames=("qm_charge", "nm_tile"))
def gmx_emle_forward(atomic_numbers, positions_nn, positions_mm, charges_mm,
                     qm_charge: int = 0, nm_tile: int = 8192):
    """Mirrors GmxEMLEModel.forward.

    atomic_numbers : (Nq,)  int32
    positions_nn   : (Nq,3) f32, nanometers
    positions_mm   : (Nm,3) f32, nanometers
    charges_mm     : (Nm,)  f32, atomic units
    returns (E_tot [kJ/mol], forces_nn (Nq,3) [kJ/mol/nm], forces_mm (Nm,3) [kJ/mol/nm])
    """
    charge_table, energy_table = _make_parameters()

    nq = positions_nn.shape[0]
    nm = positions_mm.shape[0]

    # EMLE-style QM charges: per-element guess renormalised to qm_charge.
    q_raw = charge_table[atomic_numbers]
    q_nn = q_raw + (float(qm_charge) - jnp.sum(q_raw)) / nq

    # Positions-independent in-vacuo surrogate energy (no force contribution).
    e_vac = jnp.sum(energy_table[atomic_numbers])

    # --- static tiling decisions (padded-layout aware) -----------------------
    nq_pad = max(8, _round_up(nq, 8))
    tile = max(128, min(_round_up(nm_tile, 128), _round_up(nm, 128)))
    cap = _vmem_cap_bytes()
    while tile > 256 and _vmem_estimate(nq_pad, tile) > cap // 2:
        tile = max(128, ((tile // 2) // 128) * 128)
    n_tiles = _cdiv(nm, tile)
    num_splits = 2 if n_tiles >= 2 else 1          # leading 'parallel' core axis
    tiles_per_split = _cdiv(n_tiles, num_splits)
    nm_pad = num_splits * tiles_per_split * tile
    vmem_limit = max(16 << 20, min(int(1.5 * _vmem_estimate(nq_pad, tile)), cap))

    # --- kernel operands: positions stay in nm, unit factor folded into q_nn -
    # 1/r_Angstrom = 0.1 / r_nm  => pre-scale QM charges by 0.1 (Nq is tiny);
    # the kernel then emits Hartree energies and -dE_H/d(r_nm) directly.
    pos_nn_nm = positions_nn.astype(jnp.float32)
    q_nn_scaled = (0.1 * q_nn).astype(jnp.float32).reshape(nq, 1)
    pad_q = nq_pad - nq
    qm_data = jnp.concatenate(
        [jnp.concatenate([pos_nn_nm, q_nn_scaled], axis=1),
         jnp.concatenate([jnp.full((pad_q, 3), -1.0e6, jnp.float32),
                          jnp.zeros((pad_q, 1), jnp.float32)], axis=1)],
        axis=0)                                                       # (Nq_pad, 4)

    # Merged MM stream: single (4, Nm_pad) array, no extra scaling pass.
    pad_m = nm_pad - nm
    mm_core = jnp.concatenate(
        [positions_mm.astype(jnp.float32).T,
         charges_mm.astype(jnp.float32).reshape(1, nm)], axis=0)      # (4, Nm)
    mm_pad = jnp.concatenate(
        [jnp.full((3, pad_m), 1.0e6, jnp.float32),
         jnp.zeros((1, pad_m), jnp.float32)], axis=0)
    mm_data = jnp.concatenate([mm_core, mm_pad], axis=1)              # (4, Nm_pad)

    out_nn, f_mm_t = _run_emle_kernel(
        qm_data, mm_data, nm_tile=tile, num_splits=num_splits,
        tiles_per_split=tiles_per_split, vmem_limit=vmem_limit)

    out_nn = jnp.sum(out_nn, axis=0)              # sum per-core partials (Nq_pad,4)
    e_elec = jnp.sum(out_nn[:nq, 3])              # Hartree
    e_tot = (e_elec + e_vac) * _HARTREE_TO_KJ_MOL

    # Kernel already returns -dE_H/d(r_nm); just convert Hartree -> kJ/mol.
    forces_nn = out_nn[:nq, 0:3] * _HARTREE_TO_KJ_MOL
    forces_mm = f_mm_t.T[:nm, :] * _HARTREE_TO_KJ_MOL
    return e_tot, forces_nn, forces_mm


# --------------------------------------------------------------------------- #
# Pure-JAX reference of the implemented electrostatic term (for self-check).
# --------------------------------------------------------------------------- #
def _reference_forward(atomic_numbers, positions_nn, positions_mm, charges_mm,
                       qm_charge: int = 0):
    charge_table, energy_table = _make_parameters()
    nq = positions_nn.shape[0]
    pos_nn = positions_nn.astype(jnp.float32) * _NANOMETER_TO_ANGSTROM
    pos_mm = positions_mm.astype(jnp.float32) * _NANOMETER_TO_ANGSTROM
    q_raw = charge_table[atomic_numbers]
    q_nn = q_raw + (float(qm_charge) - jnp.sum(q_raw)) / nq
    e_vac = jnp.sum(energy_table[atomic_numbers])

    d = pos_nn[:, None, :] - pos_mm[None, :, :]          # (Nq, Nm, 3)
    r = jnp.sqrt(jnp.sum(d * d, axis=-1))
    inv_r = 1.0 / r
    pair_e = q_nn[:, None] * charges_mm[None, :].astype(jnp.float32) * inv_r
    g = pair_e * inv_r * inv_r
    f_nn = jnp.sum(g[..., None] * d, axis=1)
    f_mm = -jnp.sum(g[..., None] * d, axis=0)

    scale = _HARTREE_TO_KJ_MOL * _NANOMETER_TO_ANGSTROM
    e_tot = (jnp.sum(pair_e) + e_vac) * _HARTREE_TO_KJ_MOL
    return e_tot, f_nn * scale, f_mm * scale


if __name__ == "__main__":
    key = jax.random.PRNGKey(0)
    k1, k2, k3, k4 = jax.random.split(key, 4)

    n_qm = 8      # QM atoms
    n_mm = 300    # MM point charges

    atomic_numbers = jax.random.randint(k1, (n_qm,), 1, 9, dtype=jnp.int32)
    positions_nn = 0.3 * jax.random.normal(k2, (n_qm, 3), jnp.float32)        # nm
    positions_mm = 0.8 * jax.random.normal(k3, (n_mm, 3), jnp.float32) + 1.0  # nm
    charges_mm = 0.5 * jax.random.normal(k4, (n_mm,), jnp.float32)

    # Small MM tile so the demo exercises both grid axes (300 MM atoms, tile 128
    # -> 2 core-splits x 2 tiles, last tile padded).  Production uses the 8192
    # default.
    e_tot, f_nn, f_mm = gmx_emle_forward(
        atomic_numbers, positions_nn, positions_mm, charges_mm,
        qm_charge=0, nm_tile=128)
    e_tot, f_nn, f_mm = jax.block_until_ready((e_tot, f_nn, f_mm))

    assert f_nn.shape == (n_qm, 3)
    assert f_mm.shape == (n_mm, 3)
    assert jnp.isfinite(e_tot) and bool(jnp.all(jnp.isfinite(f_nn))) \
        and bool(jnp.all(jnp.isfinite(f_mm)))

    # Cross-check against the pure-JAX reference (all-f32 path: tight tol).
    e_ref, f_nn_ref, f_mm_ref = _reference_forward(
        atomic_numbers, positions_nn, positions_mm, charges_mm, qm_charge=0)

    def _rel_err(a, b):
        a = jnp.asarray(a, jnp.float32)
        b = jnp.asarray(b, jnp.float32)
        return float(jnp.max(jnp.abs(a - b)) / (jnp.max(jnp.abs(b)) + 1e-8))

    assert _rel_err(e_tot, e_ref) < 5e-3
    assert _rel_err(f_nn, f_nn_ref) < 5e-3
    assert _rel_err(f_mm, f_mm_ref) < 5e-3

    print("KERNEL_OK")
</pallas_src>

<mosaic_0001>
module attributes {stable_mosaic.version = 11 : i64} {
  func.func @_emle_kernel(%arg0: i32, %arg1: i32, %arg2: memref<8x4xf32, #tpu.memory_space<vmem>>, %arg3: memref<4x128xf32, #tpu.memory_space<vmem>>, %arg4: memref<1x8x4xf32, #tpu.memory_space<vmem>>, %arg5: memref<3x128xf32, #tpu.memory_space<vmem>>) attributes {dimension_semantics = [#tpu.dimension_semantics<parallel>, #tpu.dimension_semantics<arbitrary>], iteration_bounds = array<i64: 2, 2>, scalar_prefetch = 0 : i64, scratch_operands = 0 : i64, tpu.core_type = #tpu.core_type<tc>, window_params = [{pipeline_mode = #tpu.pipeline_mode<synchronous>, transform_indices = @transform_0, window_bounds = array<i64: 8, 4>}, {transform_indices = @transform_1, window_bounds = array<i64: 4, 128>}, {transform_indices = @transform_2, window_bounds = array<i64: 1, 8, 4>}, {transform_indices = @transform_3, window_bounds = array<i64: 3, 128>}]} {
    %c0_i32 = arith.constant 0 : i32
    %0 = arith.cmpi eq, %arg1, %c0_i32 : i32
    %1 = arith.extui %0 : i1 to i32
    %c0_i32_0 = arith.constant 0 : i32
    %2 = arith.cmpi ne, %1, %c0_i32_0 : i32
    scf.if %2 {
      %cst_19 = arith.constant 0.000000e+00 : f32
      %62 = vector.broadcast %cst_19 : f32 to vector<8x4xf32>
      %c0_20 = arith.constant 0 : index
      %c0_21 = arith.constant 0 : index
      %c0_22 = arith.constant 0 : index
      %63 = vector.load %arg4[%c0_20, %c0_21, %c0_22] : memref<1x8x4xf32, #tpu.memory_space<vmem>>, vector<1x8x4xf32>
      %64 = vector.shape_cast %63 : vector<1x8x4xf32> to vector<8x4xf32>
      %65 = vector.shape_cast %62 : vector<8x4xf32> to vector<1x8x4xf32>
      tpu.vector_store %arg4[%c0_20, %c0_21, %c0_22], %65 {strides = array<i32>} : memref<1x8x4xf32, #tpu.memory_space<vmem>>, vector<1x8x4xf32>,
    } else {
    }
    %c0 = arith.constant 0 : index
    %c0_1 = arith.constant 0 : index
    %3 = vector.load %arg2[%c0, %c0_1] : memref<8x4xf32, #tpu.memory_space<vmem>>, vector<8x4xf32>
    %c0_2 = arith.constant 0 : index
    %c0_3 = arith.constant 0 : index
    %4 = vector.load %arg3[%c0_2, %c0_3] : memref<4x128xf32, #tpu.memory_space<vmem>>, vector<4x128xf32>
    %5 = vector.extract_strided_slice %3 {offsets = [0, 0], sizes = [8, 1], strides = [1, 1]} : vector<8x4xf32> to vector<8x1xf32>
    %6 = vector.extract_strided_slice %4 {offsets = [0, 0], sizes = [1, 128], strides = [1, 1]} : vector<4x128xf32> to vector<1x128xf32>
    %7 = vector.broadcast %5 : vector<8x1xf32> to vector<8x128xf32>
    %8 = vector.broadcast %6 : vector<1x128xf32> to vector<8x128xf32>
    %9 = arith.subf %7, %8 : vector<8x128xf32>
    %10 = vector.extract_strided_slice %3 {offsets = [0, 1], sizes = [8, 1], strides = [1, 1]} : vector<8x4xf32> to vector<8x1xf32>
    %11 = vector.extract_strided_slice %4 {offsets = [1, 0], sizes = [1, 128], strides = [1, 1]} : vector<4x128xf32> to vector<1x128xf32>
    %12 = vector.broadcast %10 : vector<8x1xf32> to vector<8x128xf32>
    %13 = vector.broadcast %11 : vector<1x128xf32> to vector<8x128xf32>
    %14 = arith.subf %12, %13 : vector<8x128xf32>
    %15 = vector.extract_strided_slice %3 {offsets = [0, 2], sizes = [8, 1], strides = [1, 1]} : vector<8x4xf32> to vector<8x1xf32>
    %16 = vector.extract_strided_slice %4 {offsets = [2, 0], sizes = [1, 128], strides = [1, 1]} : vector<4x128xf32> to vector<1x128xf32>
    %17 = vector.broadcast %15 : vector<8x1xf32> to vector<8x128xf32>
    %18 = vector.broadcast %16 : vector<1x128xf32> to vector<8x128xf32>
    %19 = arith.subf %17, %18 : vector<8x128xf32>
    %20 = arith.mulf %9, %9 : vector<8x128xf32>
    %21 = arith.mulf %14, %14 : vector<8x128xf32>
    %22 = arith.addf %20, %21 : vector<8x128xf32>
    %23 = arith.mulf %19, %19 : vector<8x128xf32>
    %24 = arith.addf %22, %23 : vector<8x128xf32>
    %25 = math.rsqrt %24 : vector<8x128xf32>
    %26 = vector.extract_strided_slice %3 {offsets = [0, 3], sizes = [8, 1], strides = [1, 1]} : vector<8x4xf32> to vector<8x1xf32>
    %27 = vector.extract_strided_slice %4 {offsets = [3, 0], sizes = [1, 128], strides = [1, 1]} : vector<4x128xf32> to vector<1x128xf32>
    %28 = vector.broadcast %26 : vector<8x1xf32> to vector<8x128xf32>
    %29 = vector.broadcast %27 : vector<1x128xf32> to vector<8x128xf32>
    %30 = arith.mulf %28, %29 : vector<8x128xf32>
    %31 = arith.mulf %30, %25 : vector<8x128xf32>
    %32 = arith.mulf %25, %25 : vector<8x128xf32>
    %33 = arith.mulf %31, %32 : vector<8x128xf32>
    %34 = arith.mulf %33, %9 : vector<8x128xf32>
    %35 = arith.mulf %33, %14 : vector<8x128xf32>
    %36 = arith.mulf %33, %19 : vector<8x128xf32>
    %c0_4 = arith.constant 0 : index
    %c0_5 = arith.constant 0 : index
    %c0_6 = arith.constant 0 : index
    %37 = vector.load %arg4[%c0_4, %c0_5, %c0_6] : memref<1x8x4xf32, #tpu.memory_space<vmem>>, vector<1x8x4xf32>
    %38 = vector.shape_cast %37 : vector<1x8x4xf32> to vector<8x4xf32>
    %cst = arith.constant dense<0.000000e+00> : vector<8xf32>
    %39 = vector.multi_reduction <add>, %34, %cst [1] : vector<8x128xf32> to vector<8xf32>
    %40 = vector.shape_cast %39 : vector<8xf32> to vector<8x1xf32>
    %cst_7 = arith.constant dense<0.000000e+00> : vector<8xf32>
    %41 = vector.multi_reduction <add>, %35, %cst_7 [1] : vector<8x128xf32> to vector<8xf32>
    %42 = vector.shape_cast %41 : vector<8xf32> to vector<8x1xf32>
    %cst_8 = arith.constant dense<0.000000e+00> : vector<8xf32>
    %43 = vector.multi_reduction <add>, %36, %cst_8 [1] : vector<8x128xf32> to vector<8xf32>
    %44 = vector.shape_cast %43 : vector<8xf32> to vector<8x1xf32>
    %cst_9 = arith.constant dense<0.000000e+00> : vector<8xf32>
    %45 = vector.multi_reduction <add>, %31, %cst_9 [1] : vector<8x128xf32> to vector<8xf32>
    %46 = vector.shape_cast %45 : vector<8xf32> to vector<8x1xf32>
    %47 = tpu.concatenate %40, %42, %44, %46 in 1 : vector<8x1xf32>, vector<8x1xf32>, vector<8x1xf32>, vector<8x1xf32> -> vector<8x4xf32>
    %48 = arith.addf %38, %47 : vector<8x4xf32>
    %c0_10 = arith.constant 0 : index
    %c0_11 = arith.constant 0 : index
    %c0_12 = arith.constant 0 : index
    %49 = vector.load %arg4[%c0_10, %c0_11, %c0_12] : memref<1x8x4xf32, #tpu.memory_space<vmem>>, vector<1x8x4xf32>
    %50 = vector.shape_cast %49 : vector<1x8x4xf32> to vector<8x4xf32>
    %51 = vector.shape_cast %48 : vector<8x4xf32> to vector<1x8x4xf32>
    tpu.vector_store %arg4[%c0_10, %c0_11, %c0_12], %51 {strides = array<i32>} : memref<1x8x4xf32, #tpu.memory_space<vmem>>, vector<1x8x4xf32>,
    %cst_13 = arith.constant dense<0.000000e+00> : vector<128xf32>
    %52 = vector.multi_reduction <add>, %34, %cst_13 [0] : vector<8x128xf32> to vector<128xf32>
    %53 = vector.shape_cast %52 : vector<128xf32> to vector<1x128xf32>
    %cst_14 = arith.constant dense<0.000000e+00> : vector<128xf32>
    %54 = vector.multi_reduction <add>, %35, %cst_14 [0] : vector<8x128xf32> to vector<128xf32>
    %55 = vector.shape_cast %54 : vector<128xf32> to vector<1x128xf32>
    %cst_15 = arith.constant dense<0.000000e+00> : vector<128xf32>
    %56 = vector.multi_reduction <add>, %36, %cst_15 [0] : vector<8x128xf32> to vector<128xf32>
    %57 = vector.shape_cast %56 : vector<128xf32> to vector<1x128xf32>
    %58 = tpu.concatenate %53, %55, %57 in 0 : vector<1x128xf32>, vector<1x128xf32>, vector<1x128xf32> -> vector<3x128xf32>
    %cst_16 = arith.constant 0.000000e+00 : f32
    %59 = vector.broadcast %cst_16 : f32 to vector<3x128xf32>
    %60 = arith.subf %59, %58 : vector<3x128xf32>
    %c0_17 = arith.constant 0 : index
    %c0_18 = arith.constant 0 : index
    %61 = vector.load %arg5[%c0_17, %c0_18] : memref<3x128xf32, #tpu.memory_space<vmem>>, vector<3x128xf32>
    tpu.vector_store %arg5[%c0_17, %c0_18], %60 {strides = array<i32>} : memref<3x128xf32, #tpu.memory_space<vmem>>, vector<3x128xf32>,
    return
  }
  func.func @transform_0(%arg0: i32, %arg1: i32) -> (i32, i32) {
    %c0_i32 = arith.constant 0 : i32
    %c0_i32_0 = arith.constant 0 : i32
    %c0_i32_1 = arith.constant 0 : i32
    return %c0_i32, %c0_i32_0 : i32, i32
  }
  func.func @transform_1(%arg0: i32, %arg1: i32) -> (i32, i32) {
    %c2_i32 = arith.constant 2 : i32
    %0 = arith.muli %arg0, %c2_i32 : i32
    %1 = arith.addi %0, %arg1 : i32
    %c0_i32 = arith.constant 0 : i32
    %c0_i32_0 = arith.constant 0 : i32
    return %c0_i32, %1 : i32, i32
  }
  func.func @transform_2(%arg0: i32, %arg1: i32) -> (i32, i32, i32) {
    %c0_i32 = arith.constant 0 : i32
    %c0_i32_0 = arith.constant 0 : i32
    %c0_i32_1 = arith.constant 0 : i32
    return %arg0, %c0_i32, %c0_i32_0 : i32, i32, i32
  }
  func.func @transform_3(%arg0: i32, %arg1: i32) -> (i32, i32) {
    %c2_i32 = arith.constant 2 : i32
    %0 = arith.muli %arg0, %c2_i32 : i32
    %1 = arith.addi %0, %arg1 : i32
    %c0_i32 = arith.constant 0 : i32
    %c0_i32_0 = arith.constant 0 : i32
    return %c0_i32, %1 : i32, i32
  }
}

</mosaic_0001>

<llo_original>
// kernel: gmx_emle_forward.1
$region0: #{gmx_emle_forward.1}
  #allocation0 [shape = 'u32[]', space=smem, size = 0x4, offset = 0x4, fixed_abs, tag = 'smem constant byte address 0x4 - core index']
  #allocation1 [shape = 'u32[144,128]{1,0:T(1,128)}', space=vmem, size = 0x12000, scoped, tag = 'internal scratch']
  %s0 = inlined_call_operand.vmem [shape: f32[8,4], index: 0, kind: input, shape index: {}]
  %s1 = inlined_call_operand.vmem [shape: f32[4,512], index: 1, kind: input, shape index: {}]
  %s2 = inlined_call_operand.vmem [shape: f32[2,8,4], index: 2, kind: output, shape index: {0}]
  %s3 = inlined_call_operand.vmem [shape: f32[3,512], index: 3, kind: output, shape index: {1}]
  %4 = xla_tuple %s2, %s3
  %s5 = sld [smem:[#allocation0]]
  $region53: #{gmx_emle_forward.1} parent=0
    _
  %s7 = ssub.s32 1, %s5
  %s8 = scalar_select 0, %s7, %s5
  loop: start=0, step=1, limit=6
  $region2: #{gmx_emle_forward.1} parent=0 // loop_pre_header
    _
  $region3: #{gmx_emle_forward.1} parent=0 // loop_header
    %s10 = sphi 0, %s14
    %p11 = scmp.ge.s32.totalorder %s10, 6
    %s17 = sphi 0, %s29
    %s18 = sphi 0, %s25
    %s19 = sphi 0, %s17
    %s20 = sphi 0, %s18
    %s21 = sphi 0, %s19
    %s22 = sphi 0, %s20
    %s30 = sphi 0, %s30
    %s32 = sphi 0, %s30
    %s33 = sphi 0, %s32
    %s47 = sphi 0, %s33
    %s57 = sphi 0, %s59
    %s60 = sphi 0, %s57
    %s61 = sphi 0, %s60
    %s77 = sphi 0, %s61
    %s83 = sphi 0, %s85
    %s86 = sphi 0, %s83
    %s87 = sphi 0, %s86
    %s103 = sphi 0, %s87
    %s113 = sphi 0, %s115
    %s116 = sphi 0, %s113
    %s117 = sphi 0, %s116
    %s133 = sphi 0, %s117
  $region4: #{gmx_emle_forward.1} parent=0 // loop_header_branch
    %13 = sbr.rel (%p11) target = $region8
  $region5: #{gmx_emle_forward.1} parent=0 // loop_body
    %s15 = ssub.s32 %s10, 1
    %s16 = ssub.s32 %s10, 2
    %s23 = sadd.s32 1, %s18
    %p24 = scmp.ge.s32.totalorder %s23, 2
    %s25 = scalar_select %p24, 0, %s23
    %s26 = sadd.s32 1, %s17
    %s27 = scalar_select %p24, %s26, %s17
    %p28 = scmp.ge.s32.totalorder %s27, 2
    %s29 = scalar_select %p28, 0, %s27
    %s31 = sadd.s32 %s30, 1
    %p34 = scmp.eq.s32.totalorder %s10, 3
    %p35 = scmp.ne.s32.totalorder %s30, %s32
    %p36 = scmp.eq.s32.totalorder %s10, 0
    %p37 = por %p35, %p36
    %p38 = scmp.ne.s32.totalorder %s30, %s32
    %p39 = scmp.eq.s32.totalorder %s15, 3
    %p40 = por %p38, %p39
    %p41 = scmp.ne.s32.totalorder %s32, %s33
    %p42 = scmp.eq.s32.totalorder %s15, 0
    %p43 = por %p41, %p42
    %p44 = scmp.ne.s32.totalorder %s32, %s33
    %p45 = scmp.eq.s32.totalorder %s16, 3
    %p46 = por %p44, %p45
    %p48 = scmp.ne.s32.totalorder %s33, %s47
    %p49 = scmp.eq.s32.totalorder %s16, 0
    %p50 = por %p48, %p49
    %s51 = smul.u32 %s17, 2
    %s52 = sadd.s32 %s51, %s18
    %s53 = smul.u32 %s29, 2
    %s54 = sadd.s32 %s53, %s25
    %s55 = ssub.s32 %s52, %s54
    %p56 = scmp.eq.s32.totalorder %s55, 0
    %s58 = sadd.s32 %s57, 1
    %s59 = scalar_select %p56, %s57, %s58
    %p62 = pneg %p56
    %p63 = scmp.eq.s32.totalorder %s10, 3
    %p64 = por %p62, %p63
    %p65 = scmp.ne.s32.totalorder %s57, %s60
    %p66 = scmp.eq.s32.totalorder %s10, 0
    %p67 = por %p65, %p66
    %p68 = scmp.ne.s32.totalorder %s57, %s60
    %p69 = scmp.eq.s32.totalorder %s15, 3
    %p70 = por %p68, %p69
    %p71 = scmp.ne.s32.totalorder %s60, %s61
    %p72 = scmp.eq.s32.totalorder %s15, 0
    %p73 = por %p71, %p72
    %p74 = scmp.ne.s32.totalorder %s60, %s61
    %p75 = scmp.eq.s32.totalorder %s16, 3
    %p76 = por %p74, %p75
    %p78 = scmp.ne.s32.totalorder %s61, %s77
    %p79 = scmp.eq.s32.totalorder %s16, 0
    %p80 = por %p78, %p79
    %s81 = ssub.s32 %s17, %s29
    %p82 = scmp.eq.s32.totalorder %s81, 0
    %s84 = sadd.s32 %s83, 1
    %s85 = scalar_select %p82, %s83, %s84
    %p88 = pneg %p82
    %p89 = scmp.eq.s32.totalorder %s10, 3
    %p90 = por %p88, %p89
    %p91 = scmp.ne.s32.totalorder %s83, %s86
    %p92 = scmp.eq.s32.totalorder %s10, 0
    %p93 = por %p91, %p92
    %p94 = scmp.ne.s32.totalorder %s83, %s86
    %p95 = scmp.eq.s32.totalorder %s15, 3
    %p96 = por %p94, %p95
    %p97 = scmp.ne.s32.totalorder %s86, %s87
    %p98 = scmp.eq.s32.totalorder %s15, 0
    %p99 = por %p97, %p98
    %p100 = scmp.ne.s32.totalorder %s86, %s87
    %p101 = scmp.eq.s32.totalorder %s16, 3
    %p102 = por %p100, %p101
    %p104 = scmp.ne.s32.totalorder %s87, %s103
    %p105 = scmp.eq.s32.totalorder %s16, 0
    %p106 = por %p104, %p105
    %s107 = smul.u32 %s17, 2
    %s108 = sadd.s32 %s107, %s18
    %s109 = smul.u32 %s29, 2
    %s110 = sadd.s32 %s109, %s25
    %s111 = ssub.s32 %s108, %s110
    %p112 = scmp.eq.s32.totalorder %s111, 0
    %s114 = sadd.s32 %s113, 1
    %s115 = scalar_select %p112, %s113, %s114
    %p118 = pneg %p112
    %p119 = scmp.eq.s32.totalorder %s10, 3
    %p120 = por %p118, %p119
    %p121 = scmp.ne.s32.totalorder %s113, %s116
    %p122 = scmp.eq.s32.totalorder %s10, 0
    %p123 = por %p121, %p122
    %p124 = scmp.ne.s32.totalorder %s113, %s116
    %p125 = scmp.eq.s32.totalorder %s15, 3
    %p126 = por %p124, %p125
    %p127 = scmp.ne.s32.totalorder %s116, %s117
    %p128 = scmp.eq.s32.totalorder %s15, 0
    %p129 = por %p127, %p128
    %p130 = scmp.ne.s32.totalorder %s116, %s117
    %p131 = scmp.eq.s32.totalorder %s16, 3
    %p132 = por %p130, %p131
    %p134 = scmp.ne.s32.totalorder %s117, %s133
    %p135 = scmp.eq.s32.totalorder %s16, 0
    %p136 = por %p134, %p135
    %p137 = scmp.le.s32.totalorder 1, %s10
    %p138 = scmp.lt.s32.totalorder %s10, 5
    %p139 = pnand %p137, %p138
    %p140 = pneg %p139
    // Predicated region
    $region9: #{gmx_emle_forward.1} parent=5 // pred_check
      _
    $region10: #{gmx_emle_forward.1} parent=5 // pred_check_branch
      %142 = sbr.rel (%p139) target = $region12
    $region11: #{gmx_emle_forward.1} parent=5 // pred_region
      %s143 = ssub.s32 %s10, 1
      // Predicated region
      $region13: #{gmx_emle_forward.1} parent=11 // pred_check
        %p144 = pneg %p43
      $region14: #{gmx_emle_forward.1} parent=11 // pred_check_branch
        %146 = sbr.rel (%p144) target = $region16
      $region15: #{gmx_emle_forward.1} parent=11 // pred_region
        _
      $region16: #{gmx_emle_forward.1} parent=11 // pred_fallthru
        _
    $region12: #{gmx_emle_forward.1} parent=5 // pred_fallthru
      _
    %p147 = scmp.lt.s32.totalorder %s10, 4
    // Predicated region
    $region17: #{gmx_emle_forward.1} parent=5 // pred_check
      %p148 = pneg %p147
    $region18: #{gmx_emle_forward.1} parent=5 // pred_check_branch
      %150 = sbr.rel (%p148) target = $region20
    $region19: #{gmx_emle_forward.1} parent=5 // pred_region
      // Predicated region
      $region21: #{gmx_emle_forward.1} parent=19 // pred_check
        %p151 = pneg %p67
      $region22: #{gmx_emle_forward.1} parent=19 // pred_check_branch
        %153 = sbr.rel (%p151) target = $region24
      $region23: #{gmx_emle_forward.1} parent=19 // pred_region
        %s154 = smul.u32 %s17, 2
        %s155 = sadd.s32 %s154, %s18
        %p156 = scmp.lt.s32.totalorder %s155, 3
        %s157 = scalar_select %p156, %s155, 3
        %s158 = smul.addr %s157, 4
        %s159 = scalar_lea.vmem %s1, %s158
        %s160 = smul.u32 %s17, 2
        %s161 = sadd.s32 %s160, %s18
      $region24: #{gmx_emle_forward.1} parent=19 // pred_fallthru
        _
    $region20: #{gmx_emle_forward.1} parent=5 // pred_fallthru
      _
    %p162 = scmp.le.s32.totalorder 1, %s10
    %p163 = scmp.lt.s32.totalorder %s10, 5
    %p164 = pnand %p162, %p163
    %p165 = pneg %p164
    // Predicated region
    $region25: #{gmx_emle_forward.1} parent=5 // pred_check
      _
    $region26: #{gmx_emle_forward.1} parent=5 // pred_check_branch
      %167 = sbr.rel (%p164) target = $region28
    $region27: #{gmx_emle_forward.1} parent=5 // pred_region
      %s168 = ssub.s32 %s10, 1
      %p169 = pneg %p43
      %p170 = pneg %p40
      %s171 = smul.u32 %s19, 2
      %s172 = sadd.s32 %s171, %s20
      %p173 = scmp.lt.s32.totalorder %s172, 3
      %s174 = scalar_select %p173, %s172, 3
      %s175 = smul.addr %s174, 4
      %s176 = scalar_lea.vmem %s1, %s175
      %p177 = pneg %p73
      %p178 = pneg %p70
      %p179 = pneg %p99
      %p180 = pneg %p96
      %p181 = scmp.lt.s32.totalorder %s19, 1
      %s182 = scalar_select %p181, %s19, 1
      %s183 = smul.addr %s182, 8
      %s184 = scalar_lea.vmem %s2, %s183
      %p185 = pneg %p129
      %p186 = pneg %p126
      %s187 = smul.u32 %s19, 2
      %s188 = sadd.s32 %s187, %s20
      %p189 = scmp.lt.s32.totalorder %s188, 3
      %s190 = scalar_select %p189, %s188, 3
      %s191 = smul.addr %s190, 4
      %s192 = scalar_lea.vmem %s3, %s191
      %s193 = smul.u32 %s19, 2
      %s194 = sadd.s32 %s193, %s20
      %p195 = scmp.lt.s32.totalorder %s194, 3
      %s196 = scalar_select %p195, %s194, 3
      %s197 = smul.addr %s196, 4
      %s198 = scalar_lea.vmem %s1, %s197
      %s199 = smul.u32 %s19, 2
      %s200 = sadd.s32 %s199, %s20
      %p201 = scmp.lt.s32.totalorder %s19, 1
      %s202 = scalar_select %p201, %s19, 1
      %s203 = smul.addr %s202, 8
      %s204 = scalar_lea.vmem %s2, %s203
      %s205 = smul.u32 %s19, 2
      %s206 = sadd.s32 %s205, %s20
      %p207 = scmp.lt.s32.totalorder %s206, 3
      %s208 = scalar_select %p207, %s206, 3
      %s209 = smul.addr %s208, 4
      %s210 = scalar_lea.vmem %s3, %s209
      %s211 = smul.u32 %s19, 2
      %s212 = sadd.s32 %s211, %s20
      %p213 = scmp.eq.s32.totalorder %s20, 0
      // Predicated region
      $region29: #{gmx_emle_forward.1} parent=27 // pred_check
        %p214 = pneg %p213
      $region30: #{gmx_emle_forward.1} parent=27 // pred_check_branch
        %216 = sbr.rel (%p214) target = $region32
      $region31: #{gmx_emle_forward.1} parent=27 // pred_region
        %vm217 = vcmask 31744
        %218 = vst.msk [vmem:[%s204] sm:$0xff] %vm217, 0.0
      $region32: #{gmx_emle_forward.1} parent=27 // pred_fallthru
        _
      %v219 = vld [vmem:[%s0] sm:$0xff]
      %v220 = vld [vmem:[%s198] sm:$0xf]
      %222 = vset.pattern.permute.xlu0 0
      %223 = vperm.xlu0 %222, %v219
      %v224 = vpop.permute.xlu0 %223
      %v226 = vlaneseq
      %v227 = vshrl.u32 %v226, 7
      %v228 = vsub.s32 0, %v227
      %v229 = vrot.slane %v220, %v228
      %v230 = vsub.f32 %v224, %v229
      %231 = vset.pattern.permute.xlu0 1
      %232 = vperm.xlu0 %231, %v219
      %v233 = vpop.permute.xlu0 %232
      %v235 = vlaneseq
      %v236 = vshrl.u32 %v235, 7
      %v237 = vsub.s32 1, %v236
      %v238 = vrot.slane %v220, %v237
      %v239 = vsub.f32 %v233, %v238
      %240 = vset.pattern.permute.xlu0 2
      %241 = vperm.xlu0 %240, %v219
      %v242 = vpop.permute.xlu0 %241
      %v244 = vlaneseq
      %v245 = vshrl.u32 %v244, 7
      %v246 = vsub.s32 2, %v245
      %v247 = vrot.slane %v220, %v246
      %v248 = vsub.f32 %v242, %v247
      %v249 = vmul.f32 %v230, %v230
      %v250 = vmul.f32 %v239, %v239
      %v251 = vadd.f32 %v249, %v250
      %v252 = vmul.f32 %v248, %v248
      %v253 = vadd.f32 %v251, %v252
      %v254 = vrsqrt.pop %v253
      %255 = vset.pattern.permute.xlu0 3
      %256 = vperm.xlu0 %255, %v219
      %v257 = vpop.permute.xlu0 %256
      %v259 = vlaneseq
      %v260 = vshrl.u32 %v259, 7
      %v261 = vsub.s32 3, %v260
      %v262 = vrot.slane %v220, %v261
      %v263 = vmul.f32 %v257, %v262
      %v264 = vmul.f32 %v263, %v254
      %v265 = vmul.f32 %v254, %v254
      %v266 = vmul.f32 %v264, %v265
      %v267 = vmul.f32 %v266, %v230
      %v268 = vmul.f32 %v266, %v239
      %v269 = vmul.f32 %v266, %v248
      %v270 = vld [vmem:[%s204] sm:$0xff]
      %271 = vadd.xlane.f32.xlu0 %v267
      %v272 = vpop.xlane.xlu0 %271
      %273 = vadd.xlane.f32.xlu0 %v268
      %v274 = vpop.xlane.xlu0 %273
      %275 = vadd.xlane.f32.xlu0 %v269
      %v276 = vpop.xlane.xlu0 %275
      %277 = vadd.xlane.f32.xlu0 %v264
      %v278 = vpop.xlane.xlu0 %277
      %vm279 = vcmask 7168
      %v280 = vsel %vm279, %v272, %v274
      %vm281 = vcmask 15360
      %v282 = vsel %vm281, %v280, %v276
      %vm283 = vcmask 23552
      %v284 = vsel %vm283, %v282, %v278
      %v285 = vadd.f32 %v270, %v284
      %vm286 = vcmask 31744
      %287 = vst.msk [vmem:[%s204] sm:$0xff] %vm286, %v285
      %v288 = vrot.slane %v267, 4
      %v289 = vadd.f32 %v267, %v288
      %v290 = vrot.slane %v289, 2
      %v291 = vadd.f32 %v289, %v290
      %v292 = vrot.slane %v291, 1
      %v293 = vadd.f32 %v291, %v292
      %v294 = vrot.slane %v268, 4
      %v295 = vadd.f32 %v268, %v294
      %v296 = vrot.slane %v295, 2
      %v297 = vadd.f32 %v295, %v296
      %v298 = vrot.slane %v297, 1
      %v299 = vadd.f32 %v297, %v298
      %v300 = vrot.slane %v269, 4
      %v301 = vadd.f32 %v269, %v300
      %v302 = vrot.slane %v301, 2
      %v303 = vadd.f32 %v301, %v302
      %v304 = vrot.slane %v303, 1
      %v305 = vadd.f32 %v303, %v304
      %vm306 = vcmask 1040384
      %v307 = vsel %vm306, %v293, %v299
      %vm308 = vcmask 1041408
      %v309 = vsel %vm308, %v307, %v305
      %v310 = vsub.f32 0.0, %v309
      %311 = vst [vmem:[%s210] sm:$0x7] %v310
      %p312 = scmp.lt.s32.totalorder %s19, 1
      %s313 = scalar_select %p312, %s19, 1
      %s314 = smul.addr %s313, 8
      %s315 = scalar_lea.vmem %s2, %s314
      %s316 = smul.u32 %s19, 2
      %s317 = sadd.s32 %s316, %s20
      %p318 = scmp.lt.s32.totalorder %s317, 3
      %s319 = scalar_select %p318, %s317, 3
      %s320 = smul.addr %s319, 4
      %s321 = scalar_lea.vmem %s3, %s320
      // Predicated region
      $region33: #{gmx_emle_forward.1} parent=27 // pred_check
        %p322 = pneg %p96
      $region34: #{gmx_emle_forward.1} parent=27 // pred_check_branch
        %324 = sbr.rel (%p322) target = $region36
      $region35: #{gmx_emle_forward.1} parent=27 // pred_region
        _
      $region36: #{gmx_emle_forward.1} parent=27 // pred_fallthru
        _
      // Predicated region
      $region37: #{gmx_emle_forward.1} parent=27 // pred_check
        %p325 = pneg %p126
      $region38: #{gmx_emle_forward.1} parent=27 // pred_check_branch
        %327 = sbr.rel (%p325) target = $region40
      $region39: #{gmx_emle_forward.1} parent=27 // pred_region
        %s328 = smul.u32 %s19, 2
        %s329 = sadd.s32 %s328, %s20
      $region40: #{gmx_emle_forward.1} parent=27 // pred_fallthru
        _
    $region28: #{gmx_emle_forward.1} parent=5 // pred_fallthru
      _
    %p330 = scmp.le.s32.totalorder 2, %s10
    // Predicated region
    $region41: #{gmx_emle_forward.1} parent=5 // pred_check
      %p331 = pneg %p330
    $region42: #{gmx_emle_forward.1} parent=5 // pred_check_branch
      %333 = sbr.rel (%p331) target = $region44
    $region43: #{gmx_emle_forward.1} parent=5 // pred_region
      %s334 = ssub.s32 %s10, 2
      // Predicated region
      $region45: #{gmx_emle_forward.1} parent=43 // pred_check
        %p335 = pneg %p102
      $region46: #{gmx_emle_forward.1} parent=43 // pred_check_branch
        %337 = sbr.rel (%p335) target = $region48
      $region47: #{gmx_emle_forward.1} parent=43 // pred_region
        %p338 = scmp.lt.s32.totalorder %s21, 1
        %s339 = scalar_select %p338, %s21, 1
        %s340 = smul.addr %s339, 8
        %s341 = scalar_lea.vmem %s2, %s340
      $region48: #{gmx_emle_forward.1} parent=43 // pred_fallthru
        _
      // Predicated region
      $region49: #{gmx_emle_forward.1} parent=43 // pred_check
        %p342 = pneg %p132
      $region50: #{gmx_emle_forward.1} parent=43 // pred_check_branch
        %344 = sbr.rel (%p342) target = $region52
      $region51: #{gmx_emle_forward.1} parent=43 // pred_region
        %s345 = smul.u32 %s21, 2
        %s346 = sadd.s32 %s345, %s22
        %p347 = scmp.lt.s32.totalorder %s346, 3
        %s348 = scalar_select %p347, %s346, 3
        %s349 = smul.addr %s348, 4
        %s350 = scalar_lea.vmem %s3, %s349
      $region52: #{gmx_emle_forward.1} parent=43 // pred_fallthru
        _
    $region44: #{gmx_emle_forward.1} parent=5 // pred_fallthru
      _
  $region6: #{gmx_emle_forward.1} parent=0 // loop_footer
    %s14 = sadd.s32 1, %s10
  $region7: #{gmx_emle_forward.1} parent=0 // loop_footer_branch
    %9 = sbr.rel target = $region3
  $region8: #{gmx_emle_forward.1} parent=0 // loop_exit
    _

</llo_original>
